<compile_context>
chip_gen: v7x
topology: tpu7x:2x2x1
jax: 0.10.0
libtpu: 0.0.40
codegen_flags: <defaults>
</compile_context>

<pallas_src>
import functools

import jax
import jax.numpy as jnp
from jax.experimental import pallas as pl
from jax.experimental.pallas import tpu as pltpu


def _bce_lovasz_kernel(tri_ref, gts_ref, err_ref, gt_ref, x_ref, y_ref,
                       out_ref, carry_ref, *, inv_b, inv_n):
    """One grid step: one `chunk` slice of the sorted rows + one dense BCE slab."""
    i = pl.program_id(0)
    f32 = jnp.float32
    B, chunk = err_ref.shape

    @pl.when(i == 0)
    def _init():
        carry_ref[...] = jnp.zeros_like(carry_ref)
        out_ref[0, 0] = 0.0

    gt_lp = gt_ref[...]                       # [B, chunk] bf16, values in {0, 1}
    gt = gt_lp.astype(f32)
    err = err_ref[...]                        # [B, chunk] f32, globally sorted descending
    gts = gts_ref[...]                        # [B, 1]  f32, total positives per image

    # Within-chunk inclusive cumsum of gt on the MXU.  Exactness comes from 0/1
    # operands (exact in bf16) + f32 accumulation (exact up to 2^24), not from
    # any particular P.
    within = jnp.dot(gt_lp, tri_ref[...], preferred_element_type=f32)   # [B, chunk]
    cum_gt = within + carry_ref[...]          # global inclusive cumsum (carry of prev chunks)

    # cumsum(1 - gt)[j] == (j + 1) - cumsum(gt)[j]  ->  no second matmul needed.
    lane = jax.lax.broadcasted_iota(jnp.int32, (B, chunk), 1)
    pos1 = (lane + i * chunk + 1).astype(f32)                # global 1-based position j+1
    inter = gts - cum_gt                                     # intersection (inclusive)
    union = inter + pos1                                     # gts + cumsum(1-gt)  (>= 1 always)

    # Exclusive union: union_ex[j] == union[j-1] for j >= 1, == gts at j == 0.
    # Clamp the denominator so gts == 0 never produces 0/0 (even in the branch
    # jnp.where discards); the clamp is a no-op for j >= 1.
    union_ex = jnp.maximum(union - 1.0 + gt, 1.0)

    # grad[j] = jac[j] - jac[j-1]  (grad[0] = jac[0]) with a single divide:
    #   j == 0 : jac[0]            = (union - inter) / union
    #   j >= 1 : jac[j] - jac[j-1] = (gt*union + inter*(1-gt)) / (union_ex*union)
    is_first = jnp.logical_and(lane == 0, i == 0)
    num = jnp.where(is_first,
                    (union - inter) * union_ex,
                    gt * union + inter * (1.0 - gt))
    grad = num / (union_ex * union)

    g = jnp.where(err > 0.0, err + 1.0, jnp.exp(err))        # elu(err) + 1
    lovasz_part = jnp.sum(g * grad)

    # BCE-with-logits on a lane-dense slab (stable formulation; one exp + one log).
    x = x_ref[...]
    y = y_ref[...]
    bce = jnp.maximum(x, 0.0) - x * y + jnp.log(1.0 + jnp.exp(-jnp.abs(x)))
    bce_part = jnp.sum(bce)

    carry_ref[...] = carry_ref[...] + jnp.sum(gt, axis=-1, keepdims=True)
    out_ref[0, 0] = out_ref[0, 0] + lovasz_part * inv_b + bce_part * inv_n


def bce_lovasz_loss(logits, targets, *, chunk=128):
    """logits, targets: [B, 1, H, W] float (targets in {0, 1}). Returns scalar loss."""
    # TODO(synk): forward only — pallas_call is not differentiable by default; a
    # training loss needs jax.custom_vjp (the backward can reuse the sorted order).
    B = logits.shape[0]
    lflat = logits.astype(jnp.float32).reshape(B, -1)
    tflat = targets.astype(jnp.float32).reshape(B, -1)
    P = lflat.shape[1]
    if P % chunk != 0 or (B * chunk) % 128 != 0:
        # TODO(synk): ragged P (e.g. 101x101 masks) would need a padded tail chunk.
        raise ValueError(f"need P % chunk == 0 and B*chunk % 128 == 0 (P={P}, B={B}, chunk={chunk})")
    num_chunks = P // chunk
    rows = (B * chunk) // 128

    # Hinge errors + ONE fused descending key/value sort (no argsort + gathers).
    signs = 2.0 * tflat - 1.0
    errors = 1.0 - lflat * signs
    neg_sorted, gt_sorted = jax.lax.sort((-errors, tflat), dimension=-1,
                                         is_stable=True, num_keys=1)
    err_sorted = -neg_sorted                      # exact
    gt_sorted = gt_sorted.astype(jnp.bfloat16)    # 0/1 labels: exact, fewer HBM bytes

    gts = jnp.sum(tflat, axis=-1, keepdims=True)  # [B, 1] positives per image (tiny pre-reduce)

    # Upper-triangular (incl. diagonal) ones: within-chunk cumsum operator for the MXU.
    tri = jnp.triu(jnp.ones((chunk, chunk), dtype=jnp.bfloat16))

    # Lane-dense layout for the BCE term (it has no per-image row structure).
    x_dense = lflat.reshape(num_chunks, rows, 128)
    y_dense = tflat.reshape(num_chunks, rows, 128)

    kernel = functools.partial(_bce_lovasz_kernel, inv_b=1.0 / B, inv_n=1.0 / (B * P))
    out = pl.pallas_call(
        kernel,
        out_shape=jax.ShapeDtypeStruct((1, 1), jnp.float32),
        grid=(num_chunks,),
        in_specs=[
            pl.BlockSpec((chunk, chunk), lambda i: (0, 0)),       # tri       (resident)
            pl.BlockSpec((B, 1), lambda i: (0, 0)),               # gts       (resident)
            pl.BlockSpec((B, chunk), lambda i: (0, i)),           # err_sorted chunk
            pl.BlockSpec((B, chunk), lambda i: (0, i)),           # gt_sorted  chunk (bf16)
            pl.BlockSpec((1, rows, 128), lambda i: (i, 0, 0)),    # logits slab
            pl.BlockSpec((1, rows, 128), lambda i: (i, 0, 0)),    # targets slab
        ],
        out_specs=pl.BlockSpec((1, 1), lambda i: (0, 0),
                               memory_space=pltpu.MemorySpace.SMEM),
        scratch_shapes=[pltpu.VMEM((B, 1), jnp.float32)],         # running-cumsum carry
        compiler_params=pltpu.CompilerParams(
            dimension_semantics=("arbitrary",)),                  # sequential scan over P
    )(tri, gts, err_sorted, gt_sorted, x_dense, y_dense)
    return out[0, 0]


def _reference(logits, targets):
    """Pure-JAX reference matching the PyTorch module (per_image=True, ignore=None)."""
    B = logits.shape[0]
    lflat = logits.astype(jnp.float32).reshape(B, -1)
    tflat = targets.astype(jnp.float32).reshape(B, -1)
    signs = 2.0 * tflat - 1.0
    errors = 1.0 - lflat * signs
    order = jnp.argsort(-errors, axis=-1)
    err_s = jnp.take_along_axis(errors, order, axis=-1)
    gt_s = jnp.take_along_axis(tflat, order, axis=-1)
    gts = jnp.sum(gt_s, axis=-1, keepdims=True)
    inter = gts - jnp.cumsum(gt_s, axis=-1)
    union = gts + jnp.cumsum(1.0 - gt_s, axis=-1)
    jac = 1.0 - inter / union
    grad = jnp.concatenate([jac[:, :1], jac[:, 1:] - jac[:, :-1]], axis=-1)
    g = jnp.where(err_s > 0.0, err_s + 1.0, jnp.exp(err_s))
    lov = jnp.mean(jnp.sum(g * grad, axis=-1))
    bce = jnp.mean(
        jnp.maximum(lflat, 0.0) - lflat * tflat + jnp.log(1.0 + jnp.exp(-jnp.abs(lflat)))
    )
    return lov + bce


if __name__ == "__main__":
    key = jax.random.PRNGKey(0)
    k1, k2 = jax.random.split(key)
    B, C, H, W = 2, 1, 16, 16
    logits = jax.random.normal(k1, (B, C, H, W), dtype=jnp.float32)
    targets = (jax.random.uniform(k2, (B, C, H, W)) > 0.5).astype(jnp.float32)

    loss = jax.jit(bce_lovasz_loss)(logits, targets)
    loss = jax.block_until_ready(loss)

    ref = _reference(logits, targets)
    assert jnp.allclose(loss, ref, rtol=1e-4, atol=1e-4), (loss, ref)
    print("KERNEL_OK")
</pallas_src>

<mosaic_0001>
module attributes {stable_mosaic.version = 11 : i64} {
  func.func @_bce_lovasz_kernel(%arg0: i32, %arg1: memref<128x128xbf16, #tpu.memory_space<vmem>>, %arg2: memref<2x1xf32, #tpu.memory_space<vmem>>, %arg3: memref<2x128xf32, #tpu.memory_space<vmem>>, %arg4: memref<2x128xbf16, #tpu.memory_space<vmem>>, %arg5: memref<1x2x128xf32, #tpu.memory_space<vmem>>, %arg6: memref<1x2x128xf32, #tpu.memory_space<vmem>>, %arg7: memref<1x1xf32, #tpu.memory_space<smem>>, %arg8: memref<2x1xf32, #tpu.memory_space<vmem>>) attributes {dimension_semantics = [#tpu.dimension_semantics<arbitrary>], iteration_bounds = array<i64: 2>, scalar_prefetch = 0 : i64, scratch_operands = 1 : i64, tpu.core_type = #tpu.core_type<tc>, window_params = [{pipeline_mode = #tpu.pipeline_mode<synchronous>, transform_indices = @transform_0, window_bounds = array<i64: 128, 128>}, {pipeline_mode = #tpu.pipeline_mode<synchronous>, transform_indices = @transform_1, window_bounds = array<i64: 2, 1>}, {transform_indices = @transform_2, window_bounds = array<i64: 2, 128>}, {transform_indices = @transform_3, window_bounds = array<i64: 2, 128>}, {transform_indices = @transform_4, window_bounds = array<i64: 1, 2, 128>}, {transform_indices = @transform_5, window_bounds = array<i64: 1, 2, 128>}, {transform_indices = @transform_6, window_bounds = array<i64: 1, 1>}]} {
    %c0_i32 = arith.constant 0 : i32
    %0 = arith.cmpi eq, %arg0, %c0_i32 : i32
    %1 = arith.extui %0 : i1 to i32
    %c0_i32_0 = arith.constant 0 : i32
    %2 = arith.cmpi ne, %1, %c0_i32_0 : i32
    scf.if %2 {
      %cst_39 = arith.constant 0.000000e+00 : f32
      %82 = vector.broadcast %cst_39 : f32 to vector<2x1xf32>
      %c0_40 = arith.constant 0 : index
      %c0_41 = arith.constant 0 : index
      %83 = vector.load %arg8[%c0_40, %c0_41] : memref<2x1xf32, #tpu.memory_space<vmem>>, vector<2x1xf32>
      tpu.vector_store %arg8[%c0_40, %c0_41], %82 {strides = array<i32>} : memref<2x1xf32, #tpu.memory_space<vmem>>, vector<2x1xf32>,
      %cst_42 = arith.constant 0.000000e+00 : f32
      %c0_43 = arith.constant 0 : index
      %c0_44 = arith.constant 0 : index
      %84 = memref.load %arg7[%c0_43, %c0_44] : memref<1x1xf32, #tpu.memory_space<smem>>
      memref.store %cst_42, %arg7[%c0_43, %c0_44] : memref<1x1xf32, #tpu.memory_space<smem>>
    } else {
    }
    %c0 = arith.constant 0 : index
    %c0_1 = arith.constant 0 : index
    %3 = vector.load %arg4[%c0, %c0_1] : memref<2x128xbf16, #tpu.memory_space<vmem>>, vector<2x128xbf16>
    %4 = arith.extf %3 : vector<2x128xbf16> to vector<2x128xf32>
    %c0_2 = arith.constant 0 : index
    %c0_3 = arith.constant 0 : index
    %5 = vector.load %arg3[%c0_2, %c0_3] : memref<2x128xf32, #tpu.memory_space<vmem>>, vector<2x128xf32>
    %c0_4 = arith.constant 0 : index
    %c0_5 = arith.constant 0 : index
    %6 = vector.load %arg2[%c0_4, %c0_5] : memref<2x1xf32, #tpu.memory_space<vmem>>, vector<2x1xf32>
    %c0_6 = arith.constant 0 : index
    %c0_7 = arith.constant 0 : index
    %7 = vector.load %arg1[%c0_6, %c0_7] : memref<128x128xbf16, #tpu.memory_space<vmem>>, vector<128x128xbf16>
    %cst = arith.constant dense<0.000000e+00> : vector<2x128xf32>
    %8 = tpu.matmul %3, %7, %cst {dimension_numbers = #tpu.dot_dimension_numbers<[1], [0], [0], [1], [0, 0, 1, 1], [], []>} : vector<2x128xbf16>, vector<128x128xbf16>, vector<2x128xf32> -> vector<2x128xf32>
    %c0_8 = arith.constant 0 : index
    %c0_9 = arith.constant 0 : index
    %9 = vector.load %arg8[%c0_8, %c0_9] : memref<2x1xf32, #tpu.memory_space<vmem>>, vector<2x1xf32>
    %10 = vector.broadcast %9 : vector<2x1xf32> to vector<2x128xf32>
    %11 = arith.addf %8, %10 : vector<2x128xf32>
    %12 = tpu.iota {dimensions = array<i32: 1>} : vector<2x128xi32>
    %c128_i32 = arith.constant 128 : i32
    %13 = arith.muli %arg0, %c128_i32 : i32
    %14 = vector.broadcast %13 : i32 to vector<2x128xi32>
    %15 = arith.addi %12, %14 : vector<2x128xi32>
    %c1_i32 = arith.constant 1 : i32
    %16 = vector.broadcast %c1_i32 : i32 to vector<2x128xi32>
    %17 = arith.addi %15, %16 : vector<2x128xi32>
    %18 = arith.sitofp %17 : vector<2x128xi32> to vector<2x128xf32>
    %19 = vector.broadcast %6 : vector<2x1xf32> to vector<2x128xf32>
    %20 = arith.subf %19, %11 : vector<2x128xf32>
    %21 = arith.addf %20, %18 : vector<2x128xf32>
    %cst_10 = arith.constant 1.000000e+00 : f32
    %22 = vector.broadcast %cst_10 : f32 to vector<2x128xf32>
    %23 = arith.subf %21, %22 : vector<2x128xf32>
    %24 = arith.addf %23, %4 : vector<2x128xf32>
    %cst_11 = arith.constant 1.000000e+00 : f32
    %25 = vector.broadcast %cst_11 : f32 to vector<2x128xf32>
    %26 = arith.maximumf %24, %25 : vector<2x128xf32>
    %c0_i32_12 = arith.constant 0 : i32
    %27 = vector.broadcast %c0_i32_12 : i32 to vector<2x128xi32>
    %28 = arith.cmpi eq, %12, %27 : vector<2x128xi32>
    %c0_i32_13 = arith.constant 0 : i32
    %29 = arith.cmpi eq, %arg0, %c0_i32_13 : i32
    %30 = vector.broadcast %29 : i1 to vector<2x128xi1>
    %31 = arith.andi %28, %30 : vector<2x128xi1>
    %32 = arith.subf %21, %20 : vector<2x128xf32>
    %33 = arith.mulf %32, %26 : vector<2x128xf32>
    %34 = arith.mulf %4, %21 : vector<2x128xf32>
    %cst_14 = arith.constant 1.000000e+00 : f32
    %35 = vector.broadcast %cst_14 : f32 to vector<2x128xf32>
    %36 = arith.subf %35, %4 : vector<2x128xf32>
    %37 = arith.mulf %20, %36 : vector<2x128xf32>
    %38 = arith.addf %34, %37 : vector<2x128xf32>
    %39 = arith.select %31, %33, %38 : vector<2x128xi1>, vector<2x128xf32>
    %40 = arith.mulf %26, %21 : vector<2x128xf32>
    %41 = arith.divf %39, %40 : vector<2x128xf32>
    %cst_15 = arith.constant 0.000000e+00 : f32
    %42 = vector.broadcast %cst_15 : f32 to vector<2x128xf32>
    %43 = arith.cmpf ogt, %5, %42 : vector<2x128xf32>
    %cst_16 = arith.constant 1.000000e+00 : f32
    %44 = vector.broadcast %cst_16 : f32 to vector<2x128xf32>
    %45 = arith.addf %5, %44 : vector<2x128xf32>
    %46 = math.exp %5 : vector<2x128xf32>
    %47 = arith.select %43, %45, %46 : vector<2x128xi1>, vector<2x128xf32>
    %48 = arith.mulf %47, %41 : vector<2x128xf32>
    %49 = vector.shape_cast %48 : vector<2x128xf32> to vector<1x2x128xf32>
    %cst_17 = arith.constant dense<0.000000e+00> : vector<1xf32>
    %50 = vector.multi_reduction <add>, %49, %cst_17 [1, 2] : vector<1x2x128xf32> to vector<1xf32>
    %51 = vector.shape_cast %50 : vector<1xf32> to vector<1x1x1xf32>
    %52 = vector.extract %51[0, 0, 0] : f32 from vector<1x1x1xf32>
    %c0_18 = arith.constant 0 : index
    %c0_19 = arith.constant 0 : index
    %c0_20 = arith.constant 0 : index
    %53 = vector.load %arg5[%c0_18, %c0_19, %c0_20] : memref<1x2x128xf32, #tpu.memory_space<vmem>>, vector<1x2x128xf32>
    %c0_21 = arith.constant 0 : index
    %c0_22 = arith.constant 0 : index
    %c0_23 = arith.constant 0 : index
    %54 = vector.load %arg6[%c0_21, %c0_22, %c0_23] : memref<1x2x128xf32, #tpu.memory_space<vmem>>, vector<1x2x128xf32>
    %cst_24 = arith.constant 0.000000e+00 : f32
    %55 = vector.broadcast %cst_24 : f32 to vector<1x2x128xf32>
    %56 = arith.maximumf %53, %55 : vector<1x2x128xf32>
    %57 = arith.mulf %53, %54 : vector<1x2x128xf32>
    %58 = arith.subf %56, %57 : vector<1x2x128xf32>
    %59 = math.absf %53 : vector<1x2x128xf32>
    %cst_25 = arith.constant 0.000000e+00 : f32
    %60 = vector.broadcast %cst_25 : f32 to vector<1x2x128xf32>
    %61 = arith.subf %60, %59 : vector<1x2x128xf32>
    %62 = math.exp %61 : vector<1x2x128xf32>
    %cst_26 = arith.constant 1.000000e+00 : f32
    %63 = vector.broadcast %cst_26 : f32 to vector<1x2x128xf32>
    %64 = arith.addf %63, %62 : vector<1x2x128xf32>
    %65 = math.log %64 : vector<1x2x128xf32>
    %66 = arith.addf %58, %65 : vector<1x2x128xf32>
    %67 = vector.shape_cast %66 : vector<1x2x128xf32> to vector<1x1x2x128xf32>
    %cst_27 = arith.constant dense<0.000000e+00> : vector<1xf32>
    %68 = vector.multi_reduction <add>, %67, %cst_27 [1, 2, 3] : vector<1x1x2x128xf32> to vector<1xf32>
    %69 = vector.shape_cast %68 : vector<1xf32> to vector<1x1x1x1xf32>
    %70 = vector.extract %69[0, 0, 0, 0] : f32 from vector<1x1x1x1xf32>
    %c0_28 = arith.constant 0 : index
    %c0_29 = arith.constant 0 : index
    %71 = vector.load %arg8[%c0_28, %c0_29] : memref<2x1xf32, #tpu.memory_space<vmem>>, vector<2x1xf32>
    %cst_30 = arith.constant dense<0.000000e+00> : vector<2xf32>
    %72 = vector.multi_reduction <add>, %4, %cst_30 [1] : vector<2x128xf32> to vector<2xf32>
    %73 = vector.shape_cast %72 : vector<2xf32> to vector<2x1xf32>
    %74 = arith.addf %71, %73 : vector<2x1xf32>
    %c0_31 = arith.constant 0 : index
    %c0_32 = arith.constant 0 : index
    %75 = vector.load %arg8[%c0_31, %c0_32] : memref<2x1xf32, #tpu.memory_space<vmem>>, vector<2x1xf32>
    tpu.vector_store %arg8[%c0_31, %c0_32], %74 {strides = array<i32>} : memref<2x1xf32, #tpu.memory_space<vmem>>, vector<2x1xf32>,
    %c0_33 = arith.constant 0 : index
    %c0_34 = arith.constant 0 : index
    %76 = memref.load %arg7[%c0_33, %c0_34] : memref<1x1xf32, #tpu.memory_space<smem>>
    %cst_35 = arith.constant 5.000000e-01 : f32
    %77 = arith.mulf %52, %cst_35 : f32
    %78 = arith.addf %76, %77 : f32
    %cst_36 = arith.constant 0.001953125 : f32
    %79 = arith.mulf %70, %cst_36 : f32
    %80 = arith.addf %78, %79 : f32
    %c0_37 = arith.constant 0 : index
    %c0_38 = arith.constant 0 : index
    %81 = memref.load %arg7[%c0_37, %c0_38] : memref<1x1xf32, #tpu.memory_space<smem>>
    memref.store %80, %arg7[%c0_37, %c0_38] : memref<1x1xf32, #tpu.memory_space<smem>>
    return
  }
  func.func @transform_0(%arg0: i32) -> (i32, i32) {
    %c0_i32 = arith.constant 0 : i32
    %c0_i32_0 = arith.constant 0 : i32
    %c0_i32_1 = arith.constant 0 : i32
    return %c0_i32, %c0_i32_0 : i32, i32
  }
  func.func @transform_1(%arg0: i32) -> (i32, i32) {
    %c0_i32 = arith.constant 0 : i32
    %c0_i32_0 = arith.constant 0 : i32
    %c0_i32_1 = arith.constant 0 : i32
    return %c0_i32, %c0_i32_0 : i32, i32
  }
  func.func @transform_2(%arg0: i32) -> (i32, i32) {
    %c0_i32 = arith.constant 0 : i32
    %c0_i32_0 = arith.constant 0 : i32
    return %c0_i32, %arg0 : i32, i32
  }
  func.func @transform_3(%arg0: i32) -> (i32, i32) {
    %c0_i32 = arith.constant 0 : i32
    %c0_i32_0 = arith.constant 0 : i32
    return %c0_i32, %arg0 : i32, i32
  }
  func.func @transform_4(%arg0: i32) -> (i32, i32, i32) {
    %c0_i32 = arith.constant 0 : i32
    %c0_i32_0 = arith.constant 0 : i32
    %c0_i32_1 = arith.constant 0 : i32
    return %arg0, %c0_i32, %c0_i32_0 : i32, i32, i32
  }
  func.func @transform_5(%arg0: i32) -> (i32, i32, i32) {
    %c0_i32 = arith.constant 0 : i32
    %c0_i32_0 = arith.constant 0 : i32
    %c0_i32_1 = arith.constant 0 : i32
    return %arg0, %c0_i32, %c0_i32_0 : i32, i32, i32
  }
  func.func @transform_6(%arg0: i32) -> (i32, i32) {
    %c0_i32 = arith.constant 0 : i32
    %c0_i32_0 = arith.constant 0 : i32
    %c0_i32_1 = arith.constant 0 : i32
    return %c0_i32, %c0_i32_0 : i32, i32
  }
}

</mosaic_0001>

<llo_original>
// kernel: neg.3
$region0: #{neg.3}
  #allocation0 [shape = 's32[1]{0}', space=sflag, size = 0x4, scoped, tag = 'scoped memory for neg.3']
  %s0 = inlined_call_operand.vmem [shape: f32[2,256], index: 0, kind: input, shape index: {}]
  %s1 = inlined_call_operand.vmem [shape: f32[2,256], index: 1, kind: output, shape index: {}]
  %v2 = vld [vmem:[%s0] sm:$0x3]
  %3 = xla_tuple %v2
  %4 = xla_tuple %3
  %v5 = vxor.u32 %v2, 2147483648
  %6 = xla_tuple %v5
  %7 = vst [vmem:[%s1] sm:$0x3] %v5
  %s8 = scalar_lea.vmem %s0, 2
  %v9 = vld [vmem:[%s8] sm:$0x3]
  %10 = xla_tuple %v9
  %11 = xla_tuple %10
  %v12 = vxor.u32 %v9, 2147483648
  %13 = xla_tuple %v12
  %s14 = scalar_lea.vmem %s1, 2
  %15 = vst [vmem:[%s14] sm:$0x3] %v12

// kernel: bce_lovasz_loss.1
$region0: #{bce_lovasz_loss.1}
  #allocation0 [shape = 'u32[]', space=smem, size = 0x4, offset = 0x4, fixed_abs, tag = 'smem constant byte address 0x4 - core index']
  #allocation1 [shape = 'u32[144,128]{1,0:T(1,128)}', space=vmem, size = 0x12000, scoped, tag = 'internal scratch']
  #allocation2 [shape = 'f32[2,1]{1,0:T(2,128)}', space=vmem, size = 0x400, scoped, tag = 'scratch operand']
  %s0 = inlined_call_operand.vmem [shape: bf16[128,128], index: 0, kind: input, shape index: {}]
  %s1 = inlined_call_operand.vmem [shape: f32[2,1], index: 1, kind: input, shape index: {}]
  %s2 = inlined_call_operand.vmem [shape: f32[2,256], index: 2, kind: input, shape index: {}]
  %s3 = inlined_call_operand.vmem [shape: bf16[2,256], index: 3, kind: input, shape index: {}]
  %s4 = inlined_call_operand.vmem [shape: f32[2,2,128], index: 4, kind: input, shape index: {}]
  %s5 = inlined_call_operand.vmem [shape: f32[2,2,128], index: 5, kind: input, shape index: {}]
  %s6 = inlined_call_operand.hbm [shape: f32[1,1], index: 6, kind: output, shape index: {}]
  %s7 = sld [smem:[#allocation0]]
  $region61: #{bce_lovasz_loss.1} parent=0
    _
  %s9 = ssub.s32 1, %s7
  %s10 = scalar_select 0, %s9, %s7
  $region1: #{bce_lovasz_loss.1} parent=0
    #allocation3 [shape = 'u8[512]{0}', space=smem, size = 0x200, scoped, tag = 'output window, operand 0, single buffered']
    #allocation4 [shape = 's32[2]{0}', space=sflag, size = 0x8, scoped, tag = 'scoped memory for bce_lovasz_loss.1']
    %11 = vsyncpa [#allocation4], 0
    loop: start=0, step=1, limit=4
    $region2: #{bce_lovasz_loss.1} parent=1 // loop_pre_header
      _
    $region3: #{bce_lovasz_loss.1} parent=1 // loop_header
      %s13 = sphi 0, %s17
      %p14 = scmp.ge.s32.totalorder %s13, 4
      %s21 = sphi 0, %s21
      %s23 = sphi 0, %s21
      %s24 = sphi 0, %s23
      %s38 = sphi 0, %s24
      %s42 = sphi 0, %s42
      %s44 = sphi 0, %s42
      %s45 = sphi 0, %s44
      %s59 = sphi 0, %s45
      %s65 = sphi 0, %s67
      %s68 = sphi 0, %s65
      %s69 = sphi 0, %s68
      %s85 = sphi 0, %s69
      %s91 = sphi 0, %s93
      %s94 = sphi 0, %s91
      %s95 = sphi 0, %s94
      %s111 = sphi 0, %s95
      %s117 = sphi 0, %s119
      %s120 = sphi 0, %s117
      %s121 = sphi 0, %s120
      %s137 = sphi 0, %s121
      %s143 = sphi 0, %s145
      %s146 = sphi 0, %s143
      %s147 = sphi 0, %s146
      %s163 = sphi 0, %s147
      %s167 = sphi 0, %s167
      %s169 = sphi 0, %s167
      %s170 = sphi 0, %s169
      %s184 = sphi 0, %s170
    $region4: #{bce_lovasz_loss.1} parent=1 // loop_header_branch
      %16 = sbr.rel (%p14) target = $region8
    $region5: #{bce_lovasz_loss.1} parent=1 // loop_body
      %s18 = ssub.s32 %s13, 1
      %s19 = ssub.s32 %s13, 2
      %s20 = sadd.s32 %s13, 1
      %s22 = sadd.s32 %s21, 1
      %p25 = scmp.eq.s32.totalorder %s13, 1
      %p26 = scmp.ne.s32.totalorder %s21, %s23
      %p27 = scmp.eq.s32.totalorder %s13, 0
      %p28 = por %p26, %p27
      %p29 = scmp.ne.s32.totalorder %s21, %s23
      %p30 = scmp.eq.s32.totalorder %s18, 1
      %p31 = por %p29, %p30
      %p32 = scmp.ne.s32.totalorder %s23, %s24
      %p33 = scmp.eq.s32.totalorder %s18, 0
      %p34 = por %p32, %p33
      %p35 = scmp.ne.s32.totalorder %s23, %s24
      %p36 = scmp.eq.s32.totalorder %s19, 1
      %p37 = por %p35, %p36
      %p39 = scmp.ne.s32.totalorder %s24, %s38
      %p40 = scmp.eq.s32.totalorder %s19, 0
      %p41 = por %p39, %p40
      %s43 = sadd.s32 %s42, 1
      %p46 = scmp.eq.s32.totalorder %s13, 1
      %p47 = scmp.ne.s32.totalorder %s42, %s44
      %p48 = scmp.eq.s32.totalorder %s13, 0
      %p49 = por %p47, %p48
      %p50 = scmp.ne.s32.totalorder %s42, %s44
      %p51 = scmp.eq.s32.totalorder %s18, 1
      %p52 = por %p50, %p51
      %p53 = scmp.ne.s32.totalorder %s44, %s45
      %p54 = scmp.eq.s32.totalorder %s18, 0
      %p55 = por %p53, %p54
      %p56 = scmp.ne.s32.totalorder %s44, %s45
      %p57 = scmp.eq.s32.totalorder %s19, 1
      %p58 = por %p56, %p57
      %p60 = scmp.ne.s32.totalorder %s45, %s59
      %p61 = scmp.eq.s32.totalorder %s19, 0
      %p62 = por %p60, %p61
      %s63 = ssub.s32 %s13, %s20
      %p64 = scmp.eq.s32.totalorder %s63, 0
      %s66 = sadd.s32 %s65, 1
      %s67 = scalar_select %p64, %s65, %s66
      %p70 = pneg %p64
      %p71 = scmp.eq.s32.totalorder %s13, 1
      %p72 = por %p70, %p71
      %p73 = scmp.ne.s32.totalorder %s65, %s68
      %p74 = scmp.eq.s32.totalorder %s13, 0
      %p75 = por %p73, %p74
      %p76 = scmp.ne.s32.totalorder %s65, %s68
      %p77 = scmp.eq.s32.totalorder %s18, 1
      %p78 = por %p76, %p77
      %p79 = scmp.ne.s32.totalorder %s68, %s69
      %p80 = scmp.eq.s32.totalorder %s18, 0
      %p81 = por %p79, %p80
      %p82 = scmp.ne.s32.totalorder %s68, %s69
      %p83 = scmp.eq.s32.totalorder %s19, 1
      %p84 = por %p82, %p83
      %p86 = scmp.ne.s32.totalorder %s69, %s85
      %p87 = scmp.eq.s32.totalorder %s19, 0
      %p88 = por %p86, %p87
      %s89 = ssub.s32 %s13, %s20
      %p90 = scmp.eq.s32.totalorder %s89, 0
      %s92 = sadd.s32 %s91, 1
      %s93 = scalar_select %p90, %s91, %s92
      %p96 = pneg %p90
      %p97 = scmp.eq.s32.totalorder %s13, 1
      %p98 = por %p96, %p97
      %p99 = scmp.ne.s32.totalorder %s91, %s94
      %p100 = scmp.eq.s32.totalorder %s13, 0
      %p101 = por %p99, %p100
      %p102 = scmp.ne.s32.totalorder %s91, %s94
      %p103 = scmp.eq.s32.totalorder %s18, 1
      %p104 = por %p102, %p103
      %p105 = scmp.ne.s32.totalorder %s94, %s95
      %p106 = scmp.eq.s32.totalorder %s18, 0
      %p107 = por %p105, %p106
      %p108 = scmp.ne.s32.totalorder %s94, %s95
      %p109 = scmp.eq.s32.totalorder %s19, 1
      %p110 = por %p108, %p109
      %p112 = scmp.ne.s32.totalorder %s95, %s111
      %p113 = scmp.eq.s32.totalorder %s19, 0
      %p114 = por %p112, %p113
      %s115 = ssub.s32 %s13, %s20
      %p116 = scmp.eq.s32.totalorder %s115, 0
      %s118 = sadd.s32 %s117, 1
      %s119 = scalar_select %p116, %s117, %s118
      %p122 = pneg %p116
      %p123 = scmp.eq.s32.totalorder %s13, 1
      %p124 = por %p122, %p123
      %p125 = scmp.ne.s32.totalorder %s117, %s120
      %p126 = scmp.eq.s32.totalorder %s13, 0
      %p127 = por %p125, %p126
      %p128 = scmp.ne.s32.totalorder %s117, %s120
      %p129 = scmp.eq.s32.totalorder %s18, 1
      %p130 = por %p128, %p129
      %p131 = scmp.ne.s32.totalorder %s120, %s121
      %p132 = scmp.eq.s32.totalorder %s18, 0
      %p133 = por %p131, %p132
      %p134 = scmp.ne.s32.totalorder %s120, %s121
      %p135 = scmp.eq.s32.totalorder %s19, 1
      %p136 = por %p134, %p135
      %p138 = scmp.ne.s32.totalorder %s121, %s137
      %p139 = scmp.eq.s32.totalorder %s19, 0
      %p140 = por %p138, %p139
      %s141 = ssub.s32 %s13, %s20
      %p142 = scmp.eq.s32.totalorder %s141, 0
      %s144 = sadd.s32 %s143, 1
      %s145 = scalar_select %p142, %s143, %s144
      %p148 = pneg %p142
      %p149 = scmp.eq.s32.totalorder %s13, 1
      %p150 = por %p148, %p149
      %p151 = scmp.ne.s32.totalorder %s143, %s146
      %p152 = scmp.eq.s32.totalorder %s13, 0
      %p153 = por %p151, %p152
      %p154 = scmp.ne.s32.totalorder %s143, %s146
      %p155 = scmp.eq.s32.totalorder %s18, 1
      %p156 = por %p154, %p155
      %p157 = scmp.ne.s32.totalorder %s146, %s147
      %p158 = scmp.eq.s32.totalorder %s18, 0
      %p159 = por %p157, %p158
      %p160 = scmp.ne.s32.totalorder %s146, %s147
      %p161 = scmp.eq.s32.totalorder %s19, 1
      %p162 = por %p160, %p161
      %p164 = scmp.ne.s32.totalorder %s147, %s163
      %p165 = scmp.eq.s32.totalorder %s19, 0
      %p166 = por %p164, %p165
      %s168 = sadd.s32 %s167, 1
      %p171 = scmp.eq.s32.totalorder %s13, 1
      %p172 = scmp.ne.s32.totalorder %s167, %s169
      %p173 = scmp.eq.s32.totalorder %s13, 0
      %p174 = por %p172, %p173
      %p175 = scmp.ne.s32.totalorder %s167, %s169
      %p176 = scmp.eq.s32.totalorder %s18, 1
      %p177 = por %p175, %p176
      %p178 = scmp.ne.s32.totalorder %s169, %s170
      %p179 = scmp.eq.s32.totalorder %s18, 0
      %p180 = por %p178, %p179
      %p181 = scmp.ne.s32.totalorder %s169, %s170
      %p182 = scmp.eq.s32.totalorder %s19, 1
      %p183 = por %p181, %p182
      %p185 = scmp.ne.s32.totalorder %s170, %s184
      %p186 = scmp.eq.s32.totalorder %s19, 0
      %p187 = por %p185, %p186
      %p188 = scmp.le.s32.totalorder 1, %s13
      %p189 = scmp.lt.s32.totalorder %s13, 3
      %p190 = pnand %p188, %p189
      %p191 = pneg %p190
      // Predicated region
      $region9: #{bce_lovasz_loss.1} parent=5 // pred_check
        _
      $region10: #{bce_lovasz_loss.1} parent=5 // pred_check_branch
        %193 = sbr.rel (%p190) target = $region12
      $region11: #{bce_lovasz_loss.1} parent=5 // pred_region
        %s194 = ssub.s32 %s13, 1
        // Predicated region
        $region13: #{bce_lovasz_loss.1} parent=11 // pred_check
          %p195 = pneg %p34
        $region14: #{bce_lovasz_loss.1} parent=11 // pred_check_branch
          %197 = sbr.rel (%p195) target = $region16
        $region15: #{bce_lovasz_loss.1} parent=11 // pred_region
          _
        $region16: #{bce_lovasz_loss.1} parent=11 // pred_fallthru
          _
        // Predicated region
        $region17: #{bce_lovasz_loss.1} parent=11 // pred_check
          %p198 = pneg %p55
        $region18: #{bce_lovasz_loss.1} parent=11 // pred_check_branch
          %200 = sbr.rel (%p198) target = $region20
        $region19: #{bce_lovasz_loss.1} parent=11 // pred_region
          _
        $region20: #{bce_lovasz_loss.1} parent=11 // pred_fallthru
          _
      $region12: #{bce_lovasz_loss.1} parent=5 // pred_fallthru
        _
      %p201 = scmp.lt.s32.totalorder %s13, 2
      // Predicated region
      $region21: #{bce_lovasz_loss.1} parent=5 // pred_check
        %p202 = pneg %p201
      $region22: #{bce_lovasz_loss.1} parent=5 // pred_check_branch
        %204 = sbr.rel (%p202) target = $region24
      $region23: #{bce_lovasz_loss.1} parent=5 // pred_region
        // Predicated region
        $region25: #{bce_lovasz_loss.1} parent=23 // pred_check
          %p205 = pneg %p75
        $region26: #{bce_lovasz_loss.1} parent=23 // pred_check_branch
          %207 = sbr.rel (%p205) target = $region28
        $region27: #{bce_lovasz_loss.1} parent=23 // pred_region
          %p208 = scmp.lt.s32.totalorder %s13, 1
          %s209 = scalar_select %p208, %s13, 1
          %s210 = smul.addr %s209, 2
          %s211 = scalar_lea.vmem %s2, %s210
        $region28: #{bce_lovasz_loss.1} parent=23 // pred_fallthru
          _
        // Predicated region
        $region29: #{bce_lovasz_loss.1} parent=23 // pred_check
          %p212 = pneg %p101
        $region30: #{bce_lovasz_loss.1} parent=23 // pred_check_branch
          %214 = sbr.rel (%p212) target = $region32
        $region31: #{bce_lovasz_loss.1} parent=23 // pred_region
          %p215 = scmp.lt.s32.totalorder %s13, 1
          %s216 = scalar_select %p215, %s13, 1
          %s217 = scalar_lea.vmem %s3, %s216
        $region32: #{bce_lovasz_loss.1} parent=23 // pred_fallthru
          _
        // Predicated region
        $region33: #{bce_lovasz_loss.1} parent=23 // pred_check
          %p218 = pneg %p127
        $region34: #{bce_lovasz_loss.1} parent=23 // pred_check_branch
          %220 = sbr.rel (%p218) target = $region36
        $region35: #{bce_lovasz_loss.1} parent=23 // pred_region
          %p221 = scmp.lt.s32.totalorder %s13, 1
          %s222 = scalar_select %p221, %s13, 1
          %s223 = smul.addr %s222, 2
          %s224 = scalar_lea.vmem %s4, %s223
        $region36: #{bce_lovasz_loss.1} parent=23 // pred_fallthru
          _
        // Predicated region
        $region37: #{bce_lovasz_loss.1} parent=23 // pred_check
          %p225 = pneg %p153
        $region38: #{bce_lovasz_loss.1} parent=23 // pred_check_branch
          %227 = sbr.rel (%p225) target = $region40
        $region39: #{bce_lovasz_loss.1} parent=23 // pred_region
          %p228 = scmp.lt.s32.totalorder %s13, 1
          %s229 = scalar_select %p228, %s13, 1
          %s230 = smul.addr %s229, 2
          %s231 = scalar_lea.vmem %s5, %s230
        $region40: #{bce_lovasz_loss.1} parent=23 // pred_fallthru
          _
      $region24: #{bce_lovasz_loss.1} parent=5 // pred_fallthru
        _
      %p232 = scmp.le.s32.totalorder 1, %s13
      %p233 = scmp.lt.s32.totalorder %s13, 3
      %p234 = pnand %p232, %p233
      %p235 = pneg %p234
      // Predicated region
      $region41: #{bce_lovasz_loss.1} parent=5 // pred_check
        _
      $region42: #{bce_lovasz_loss.1} parent=5 // pred_check_branch
        %237 = sbr.rel (%p234) target = $region44
      $region43: #{bce_lovasz_loss.1} parent=5 // pred_region
        %s238 = ssub.s32 %s13, 1
        %p239 = pneg %p34
        %p240 = pneg %p31
        %p241 = pneg %p55
        %p242 = pneg %p52
        %p243 = scmp.lt.s32.totalorder %s18, 1
        %s244 = scalar_select %p243, %s18, 1
        %s245 = smul.addr %s244, 2
        %s246 = scalar_lea.vmem %s2, %s245
        %p247 = pneg %p81
        %p248 = pneg %p78
        %p249 = scmp.lt.s32.totalorder %s18, 1
        %s250 = scalar_select %p249, %s18, 1
        %s251 = scalar_lea.vmem %s3, %s250
        %p252 = pneg %p107
        %p253 = pneg %p104
        %p254 = scmp.lt.s32.totalorder %s18, 1
        %s255 = scalar_select %p254, %s18, 1
        %s256 = smul.addr %s255, 2
        %s257 = scalar_lea.vmem %s4, %s256
        %p258 = pneg %p133
        %p259 = pneg %p130
        %p260 = scmp.lt.s32.totalorder %s18, 1
        %s261 = scalar_select %p260, %s18, 1
        %s262 = smul.addr %s261, 2
        %s263 = scalar_lea.vmem %s5, %s262
        %p264 = pneg %p159
        %p265 = pneg %p156
        %p266 = pneg %p180
        %p267 = pneg %p177
        %p268 = scmp.lt.s32.totalorder %s18, 1
        %s269 = scalar_select %p268, %s18, 1
        %s270 = smul.addr %s269, 2
        %s271 = scalar_lea.vmem %s2, %s270
        %p272 = scmp.lt.s32.totalorder %s18, 1
        %s273 = scalar_select %p272, %s18, 1
        %s274 = scalar_lea.vmem %s3, %s273
        %p275 = scmp.lt.s32.totalorder %s18, 1
        %s276 = scalar_select %p275, %s18, 1
        %s277 = smul.addr %s276, 2
        %s278 = scalar_lea.vmem %s4, %s277
        %p279 = scmp.lt.s32.totalorder %s18, 1
        %s280 = scalar_select %p279, %s18, 1
        %s281 = smul.addr %s280, 2
        %s282 = scalar_lea.vmem %s5, %s281
        %p284 = scmp.eq.s32.totalorder %s18, 0
        // Predicated region
        $region45: #{bce_lovasz_loss.1} parent=43 // pred_check
          %p285 = pneg %p284
        $region46: #{bce_lovasz_loss.1} parent=43 // pred_check_branch
          %287 = sbr.rel (%p285) target = $region48
        $region47: #{bce_lovasz_loss.1} parent=43 // pred_region
          %vm288 = vcmask 1024
          %289 = vst.msk [vmem:[#allocation2] sm:$0x3] %vm288, 0.0
          %s290 = scalar_lea.smem [#allocation3], 0
          %291 = sst [smem:[%s290]] 0.0
        $region48: #{bce_lovasz_loss.1} parent=43 // pred_fallthru
          _
        %v292 = vld [vmem:[%s274] sm:$0x1]
        %v293 = vunpack.c.l.bf16 %v292
        %v294 = vld [vmem:[%s271] sm:$0x3]
        %v295 = vld [vmem:[%s1] sm:$0x3]
        %v296 = vld [vmem:[%s0] sm:$0xf]
        %v297 = vld [vmem:[%s0 + $0x4] sm:$0xf]
        %v298 = vld [vmem:[%s0 + $0x8] sm:$0xf]
        %v299 = vld [vmem:[%s0 + $0xc] sm:$0xf]
        %v300 = vld [vmem:[%s0 + $0x10] sm:$0xf]
        %v301 = vld [vmem:[%s0 + $0x14] sm:$0xf]
        %v302 = vld [vmem:[%s0 + $0x18] sm:$0xf]
        %v303 = vld [vmem:[%s0 + $0x1c] sm:$0xf]
        %v304 = vld [vmem:[%s0 + $0x20] sm:$0xf]
        %v305 = vld [vmem:[%s0 + $0x24] sm:$0xf]
        %v306 = vld [vmem:[%s0 + $0x28] sm:$0xf]
        %v307 = vld [vmem:[%s0 + $0x2c] sm:$0xf]
        %v308 = vld [vmem:[%s0 + $0x30] sm:$0xf]
        %v309 = vld [vmem:[%s0 + $0x34] sm:$0xf]
        %v310 = vld [vmem:[%s0 + $0x38] sm:$0xf]
        %v311 = vld [vmem:[%s0 + $0x3c] sm:$0xf]
        %v312 = vld [vmem:[#allocation2] sm:$0x3]
        %314 = vset.pattern.permute.xlu0 0
        %315 = vperm.xlu0 %314, %v312
        %v316 = vpop.permute.xlu0 %315
        %v334 = vunpack.c.l.b16 %v296
        %v335 = vunpack.c.l.b16 %v297
        %v336 = vunpack.c.l.b16 %v298
        %v337 = vunpack.c.l.b16 %v299
        %v338 = vunpack.c.l.b16 %v300
        %v339 = vunpack.c.l.b16 %v301
        %v340 = vunpack.c.l.b16 %v302
        %v341 = vunpack.c.l.b16 %v303
        %v342 = vunpack.c.l.b16 %v304
        %v343 = vunpack.c.l.b16 %v305
        %v344 = vunpack.c.l.b16 %v306
        %v345 = vunpack.c.l.b16 %v307
        %v346 = vunpack.c.l.b16 %v308
        %v347 = vunpack.c.l.b16 %v309
        %v348 = vunpack.c.l.b16 %v310
        %v349 = vunpack.c.l.b16 %v311
        %v350 = vpack.c.b16 %v335, %v334
        %v351 = vpack.c.b16 %v337, %v336
        %v352 = vpack.c.b16 %v339, %v338
        %v353 = vpack.c.b16 %v341, %v340
        %v354 = vpack.c.b16 %v343, %v342
        %v355 = vpack.c.b16 %v345, %v344
        %v356 = vpack.c.b16 %v347, %v346
        %v357 = vpack.c.b16 %v349, %v348
        %366 = vmatprep.subr.bf16.mxu0 0
        %367 = vmatpush1.bf16.msra.mxu0 %v350
        %368 = vmatprep.subr.bf16.mxu0 0
        %369 = vmatpush1.bf16.msra.mxu0 %v351
        %370 = vmatprep.subr.bf16.mxu0 0
        %371 = vmatpush1.bf16.msra.mxu0 %v352
        %372 = vmatprep.subr.bf16.mxu0 0
        %373 = vmatpush1.bf16.msra.mxu0 %v353
        %374 = vmatprep.subr.bf16.mxu0 0
        %375 = vmatpush1.bf16.msra.mxu0 %v354
        %376 = vmatprep.subr.bf16.mxu0 0
        %377 = vmatpush1.bf16.msra.mxu0 %v355
        %378 = vmatprep.subr.bf16.mxu0 0
        %379 = vmatpush1.bf16.msra.mxu0 %v356
        %380 = vmatprep.subr.bf16.mxu0 0
        %381 = vmatpush1.bf16.msra.mxu0 %v357
        %382 = vmatprep.subr.bf16.mxu0 0
        %383 = vmatpush1.bf16.msra.mxu0 0
        %384 = vmatprep.subr.bf16.mxu0 0
        %385 = vmatpush1.bf16.msra.mxu0 0
        %386 = vmatprep.subr.bf16.mxu0 0
        %387 = vmatpush1.bf16.msra.mxu0 0
        %388 = vmatprep.subr.bf16.mxu0 0
        %389 = vmatpush1.bf16.msra.mxu0 0
        %390 = vmatprep.subr.bf16.mxu0 0
        %391 = vmatpush1.bf16.msra.mxu0 0
        %392 = vmatprep.subr.bf16.mxu0 0
        %393 = vmatpush1.bf16.msra.mxu0 0
        %394 = vmatprep.subr.bf16.mxu0 0
        %395 = vmatpush1.bf16.msra.mxu0 0
        %396 = vmatprep.subr.bf16.mxu0 0
        %397 = vmatpush1.bf16.msra.mxu0 0
        %398 = vmatprep.mubr.bf16.mxu0 0
        %399 = vmatmul.mubr.bf16.gmra.mrb[0].mxu0 %v292
        %v400 = vpop.f32.mrb[0].mxu0
        %v401 = vadd.f32 %v316, %v400
        %v402 = vpop.f32.mrb[0].mxu0
        %v403 = vpop.f32.mrb[0].mxu0
        %v404 = vpop.f32.mrb[0].mxu0
        %405 = vdwg.mxu0
        %v406 = vlaneseq
        %v407 = vand.u32 %v406, 127
        %s408 = smul.u32 %s18, 128
        %v409 = vstv %s408
        %v410 = vadd.s32 %v407, %v409
        %v411 = vadd.s32 %v410, 1
        %v412 = vcvt.s32.f32 %v411
        %414 = vset.pattern.permute.xlu0 0
        %415 = vperm.xlu0 %414, %v295
        %v416 = vpop.permute.xlu0 %415
        %v418 = vsub.f32 %v416, %v401
        %v419 = vadd.f32 %v418, %v412
        %v420 = vsub.f32 %v419, 1.0
        %v421 = vadd.f32 %v420, %v293
        %v422 = vmax.f32 %v421, 1.0
        %vm423 = vcmp.eq.s32.totalorder %v407, 0
        %s424 = scalar_select %p284, 1, 0
        %v425 = vstv %s424
        %vm426 = vcmp.eq.s32.totalorder %v425, 1
        %vm427 = vmand %vm423, %vm426
        %v428 = vsub.f32 %v419, %v418
        %v429 = vmul.f32 %v428, %v422
        %v430 = vmul.f32 %v293, %v419
        %v431 = vsub.f32 1.0, %v293
        %v432 = vmul.f32 %v418, %v431
        %v433 = vadd.f32 %v430, %v432
        %v434 = vsel %vm427, %v429, %v433
        %v435 = vmul.f32 %v422, %v419
        %v436 = vrcp.pop %v435
        %v437 = vmul.f32 %v434, %v436
        %vm438 = vcmp.gt.f32.partialorder %v294, 0.0
        %v439 = vadd.f32 %v294, 1.0
        %v440 = vmul.f32 %v294, 1.442695
        %v441 = vpow.pop %v440
        %v442 = vsel %vm438, %v439, %v441
        %v443 = vmul.f32 %v442, %v437
        %vm444 = vcmask 1041408
        %v445 = vsel %vm444, %v443, 0.0
        %446 = vadd.xlane.f32.xlu0 %v445
        %v447 = vpop.xlane.xlu0 %446
        %v448 = vrot.slane %v447, 4
        %v449 = vadd.f32 %v447, %v448
        %v450 = vrot.slane %v449, 2
        %v451 = vadd.f32 %v449, %v450
        %v452 = vrot.slane %v451, 1
        %v453 = vadd.f32 %v451, %v452
        %s454 = vtos %v453
        %v455 = vld [vmem:[%s278] sm:$0x3]
        %v456 = vld [vmem:[%s282] sm:$0x3]
        %v457 = vmax.f32 %v455, 0.0
        %v458 = vmul.f32 %v455, %v456
        %v459 = vsub.f32 %v457, %v458
        %v460 = vand.u32 2147483647, %v455
        %v461 = vsub.f32 0.0, %v460
        %v462 = vmul.f32 %v461, 1.442695
        %v463 = vpow.pop %v462
        %v464 = vadd.f32 %v463, 1.0
        %v465 = vlog2.pop %v464
        %v466 = vmul.f32 %v465, 0.6931472
        %v467 = vadd.f32 %v459, %v466
        %v468 = vsel %vm444, %v467, 0.0
        %469 = vadd.xlane.f32.xlu0 %v468
        %v470 = vpop.xlane.xlu0 %469
        %v471 = vrot.slane %v470, 4
        %v472 = vadd.f32 %v470, %v471
        %v473 = vrot.slane %v472, 2
        %v474 = vadd.f32 %v472, %v473
        %v475 = vrot.slane %v474, 1
        %v476 = vadd.f32 %v474, %v475
        %s477 = vtos %v476
        %v478 = vsel %vm444, %v293, 0.0
        %479 = vadd.xlane.f32.xlu0 %v478
        %v480 = vpop.xlane.xlu0 %479
        %v481 = vadd.f32 %v312, %v480
        %vm482 = vcmask 1024
        %483 = vst.msk [vmem:[#allocation2] sm:$0x3] %vm482, %v481
        %s484 = sld [smem:[#allocation3]]
        %s485 = smul.f32 %s454, 0.5
        %s486 = sadd.f32 %s484, %s485
        %s487 = smul.f32 %s477, 0.001953125
        %s488 = sadd.f32 %s486, %s487
        %s489 = scalar_lea.smem [#allocation3], 0
        %490 = sst [smem:[%s489]] %s488
        // Predicated region
        $region49: #{bce_lovasz_loss.1} parent=43 // pred_check
          %p491 = pneg %p177
        $region50: #{bce_lovasz_loss.1} parent=43 // pred_check_branch
          %493 = sbr.rel (%p491) target = $region52
        $region51: #{bce_lovasz_loss.1} parent=43 // pred_region
          %s495 = ssub.s32 16, 16
          %496 = vsyncadd [#allocation4], %s495
          %499 = dma.smem_to_hbm [#allocation3], 16, %s6, [#allocation4]
        $region52: #{bce_lovasz_loss.1} parent=43 // pred_fallthru
          _
        // Predicated region
        $region53: #{bce_lovasz_loss.1} parent=43 // pred_check
          %p500 = pneg %p177
        $region54: #{bce_lovasz_loss.1} parent=43 // pred_check_branch
          %502 = sbr.rel (%p500) target = $region56
        $region55: #{bce_lovasz_loss.1} parent=43 // pred_region
          %503 = dma.done [#allocation4], 16
        $region56: #{bce_lovasz_loss.1} parent=43 // pred_fallthru
          _
        %504 = sfence
      $region44: #{bce_lovasz_loss.1} parent=5 // pred_fallthru
        _
      %p505 = scmp.le.s32.totalorder 2, %s13
      // Predicated region
      $region57: #{bce_lovasz_loss.1} parent=5 // pred_check
        %p506 = pneg %p505
      $region58: #{bce_lovasz_loss.1} parent=5 // pred_check_branch
        %508 = sbr.rel (%p506) target = $region60
      $region59: #{bce_lovasz_loss.1} parent=5 // pred_region
        %s509 = ssub.s32 %s13, 2
      $region60: #{bce_lovasz_loss.1} parent=5 // pred_fallthru
        _
    $region6: #{bce_lovasz_loss.1} parent=1 // loop_footer
      %s17 = sadd.s32 1, %s13
    $region7: #{bce_lovasz_loss.1} parent=1 // loop_footer_branch
      %12 = sbr.rel target = $region3
    $region8: #{bce_lovasz_loss.1} parent=1 // loop_exit
      _
    %510 = vsyncpa [#allocation4], 1
    %s511 = scalar_lea.sflag [#allocation4], 1
    %512 = vsyncpa %s511, 1

</llo_original>
